<compile_context>
chip_gen: v7x
topology: tpu7x:2x2x1
jax: 0.10.0
libtpu: 0.0.40
codegen_flags: <defaults>
</compile_context>

<pallas_src>
import math
from functools import partial

import jax
import jax.numpy as jnp
import numpy as np
from jax import lax
from jax.experimental import pallas as pl
from jax.experimental.pallas import tpu as pltpu


def _self_attention_kernel(qkv_ref, w_ref, bias_ref, ctx_ref, q_ref, k_ref, *,
                           n_batch, seq_len, d_k, use_bf16_mxu):
    """One packed block: n_batch batch elements side-by-side on the lane axis.

    qkv_ref : (1, 3, d_model, L)   L = n_batch * seq_len   (stacked q/k/v)
    w_ref   : (3, d_model, d_model)                        (stacked wq/wk/wv)
    bias_ref: (d_k, d_k)   additive score bias (head block-diag + user mask)
    ctx_ref : (1, d_k, L)
    q_ref   : (1, d_model, L)
    k_ref   : (1, d_model, L)
    """
    qkv = qkv_ref[0]                       # (3, D, L)
    w = w_ref[...]                         # (3, D, D)

    x_q, x_k, x_v = qkv[0], qkv[1], qkv[2]
    wq, wk, wv = w[0], w[1], w[2]

    mm_dtype = jnp.bfloat16 if use_bf16_mxu else jnp.float32
    if use_bf16_mxu:
        x_q, x_k, x_v = (t.astype(mm_dtype) for t in (x_q, x_k, x_v))
        wq, wk, wv = (t.astype(mm_dtype) for t in (wq, wk, wv))

    # Channels-first nn.Linear: y = W @ x (no operand transpose needed); the
    # lane axis of every matmul / store is the full packed width L.
    q = jnp.dot(wq, x_q, preferred_element_type=jnp.float32)   # (D, L)
    k = jnp.dot(wk, x_k, preferred_element_type=jnp.float32)
    v = jnp.dot(wv, x_v, preferred_element_type=jnp.float32)

    q_ref[0] = q.astype(q_ref.dtype)       # lane-dense stores, width L
    k_ref[0] = k.astype(k_ref.dtype)

    inv_scale = 1.0 / math.sqrt(d_k)
    bias = bias_ref[...]

    # Per-packed-batch attention.  n_batch is a small static constant, so a
    # static Python loop gives static (zero-cost) lane slices; the (d_k, d_k)
    # score/softmax/ctx math per element is tiny next to the projections.
    ctx_parts = []
    for bi in range(n_batch):
        lo = bi * seq_len
        q_b = q[:, lo:lo + seq_len]        # (d_k, N)
        k_b = k[:, lo:lo + seq_len]
        v_b = v[:, lo:lo + seq_len]

        # All heads' score blocks in ONE MXU matmul: contract the sequence
        # axis of both operands -> (d_k, d_k) Gram matrix.
        # TODO(synk): if a bundle dump shows the lane-axis contraction's
        # implicit transpose (vxpose) contending with vmatmul at large N,
        # produce k^T per tile instead; irrelevant at these sizes.
        s = lax.dot_general(q_b, k_b, (((1,), (1,)), ((), ())),
                            preferred_element_type=jnp.float32)
        s = s * inv_scale + bias

        # Softmax over the full d_k axis; the -1e9 bias makes off-head /
        # masked entries underflow to exactly 0 in f32, so this equals the
        # per-head softmax of the PyTorch module.
        smax = jnp.max(s, axis=-1, keepdims=True)
        e = jnp.exp(s - smax)
        denom = jnp.sum(e, axis=-1, keepdims=True)
        attn = e * pl.reciprocal(denom, approx=False)   # exact recip (EUP)

        ctx_b = jnp.dot(attn.astype(mm_dtype), v_b.astype(mm_dtype),
                        preferred_element_type=jnp.float32)  # (d_k, N)
        ctx_parts.append(ctx_b)

    ctx = ctx_parts[0] if n_batch == 1 else jnp.concatenate(ctx_parts, axis=1)
    ctx_ref[0] = ctx.astype(ctx_ref.dtype)  # single lane-dense store, width L


def _choose_block_batch(B, N, d_model, d_k, vmem_cap_bytes, target_lanes=512):
    """Pick how many batch elements to pack per grid step."""
    # Lane-density first (narrow masked stores were the dominant loss at the
    # shipped shapes), up to ~target_lanes lanes per block.
    b_blk = max(1, min(B, target_lanes // max(N, 1)))
    # ...but keep >=2 grid blocks for v7x megacore whenever that does not drop
    # the lane width below one full vreg row (128 lanes).
    while b_blk > 1 and B // b_blk < 2 and (b_blk // 2) * N >= 128:
        b_blk //= 2

    def footprint(bb):
        L = bb * N
        per_step = (3 + 2) * d_model * L + d_k * L        # qkv in + q/k out + ctx out
        resident = 3 * d_model * d_model + d_k * d_k      # weights + bias
        return 2 * (per_step + resident) * 4              # double-buffered f32

    # Clamp against the chip's VMEM (v7x has only 64 MiB per TensorCore).
    budget = int(0.4 * vmem_cap_bytes)
    while b_blk > 1 and footprint(b_blk) > budget:
        b_blk //= 2
    while B % b_blk:
        b_blk -= 1
    return b_blk, footprint(b_blk)


def self_attention_pallas(v, q, k, wq, wk, wv, mask, *, d_k, nhead,
                          use_bf16_mxu=False):
    """v, q, k: (B, d_model, N) float32 (PyTorch channels-first 1D layout).

    Returns (context, q_proj, k_proj) with shapes ((B, d_k, N),
    (B, d_model, N), (B, d_model, N)), matching the PyTorch forward().
    """
    B, d_model, N = q.shape
    assert d_k == d_model, "module's .view() requires d_k == d_model"
    assert d_k % nhead == 0
    d_h = d_k // nhead

    try:
        info = pltpu.get_tpu_info()
        vmem_cap = int(getattr(info, "vmem_capacity_bytes", 64 << 20))
    except Exception:
        vmem_cap = 64 << 20   # conservative fallback (= v7x per-TC VMEM)

    b_blk, fp_bytes = _choose_block_batch(B, N, d_model, d_k, vmem_cap)
    n_blocks = B // b_blk
    L = b_blk * N

    # Pack b_blk batch elements side-by-side on the lane axis and stack q/k/v
    # so each grid step issues ONE contiguous input DMA.  (Pure layout
    # plumbing in the wrapper; XLA fuses the transpose + stack into one pass.)
    def pack(x):
        x = x.reshape(n_blocks, b_blk, d_model, N)
        return jnp.transpose(x, (0, 2, 1, 3)).reshape(n_blocks, d_model, L)

    qkv = jnp.stack([pack(q), pack(k), pack(v)], axis=1)    # (n_blocks, 3, D, L)
    w = jnp.stack([wq, wk, wv], axis=0)                     # (3, D, D)

    # Fold the per-head block-diagonal structure and the user mask into one
    # additive (d_k, d_k) score bias: 0 where (same head AND mask != 0),
    # -1e9 elsewhere.  NOTE: assumes a single static (d_h, d_h) mask shared
    # across batch and heads (as in the PyTorch module); a per-batch/per-head
    # mask would have to be passed into the kernel instead.
    head_id = jnp.arange(d_k, dtype=jnp.int32) // d_h
    same_head = head_id[:, None] == head_id[None, :]
    mask_tiled = jnp.tile(jnp.asarray(mask) != 0, (nhead, nhead))
    bias = jnp.where(same_head & mask_tiled, 0.0, -1e9).astype(jnp.float32)

    kernel = partial(_self_attention_kernel, n_batch=b_blk, seq_len=N,
                     d_k=d_k, use_bf16_mxu=use_bf16_mxu)

    qkv_spec = pl.BlockSpec((1, 3, d_model, L), lambda b: (b, 0, 0, 0))
    ctx_spec = pl.BlockSpec((1, d_k, L), lambda b: (b, 0, 0))
    proj_spec = pl.BlockSpec((1, d_model, L), lambda b: (b, 0, 0))
    # Weights / bias: constant index_map -> resident across grid steps.
    # Single-buffer them once they are big enough for the double buffer to
    # cost real VMEM (irrelevant at d_model = 32/64).
    if d_model >= 256:
        w_spec = pl.BlockSpec((3, d_model, d_model), lambda b: (0, 0, 0),
                              pipeline_mode=pl.Buffered(1))
        bias_spec = pl.BlockSpec((d_k, d_k), lambda b: (0, 0),
                                 pipeline_mode=pl.Buffered(1))
    else:
        w_spec = pl.BlockSpec((3, d_model, d_model), lambda b: (0, 0, 0))
        bias_spec = pl.BlockSpec((d_k, d_k), lambda b: (0, 0))

    # Explicit VMEM budget (default scoped limit is 16/32 MiB depending on
    # generation; physical is 64 MiB on v7x, 128 MiB on v5e/v6e).
    vmem_limit = int(min(max(fp_bytes + (4 << 20), 16 << 20),
                         int(0.75 * vmem_cap)))

    ctx_p, q_p, k_p = pl.pallas_call(
        kernel,
        out_shape=(
            jax.ShapeDtypeStruct((n_blocks, d_k, L), jnp.float32),
            jax.ShapeDtypeStruct((n_blocks, d_model, L), jnp.float32),
            jax.ShapeDtypeStruct((n_blocks, d_model, L), jnp.float32),
        ),
        grid_spec=pltpu.PrefetchScalarGridSpec(
            num_scalar_prefetch=0,
            grid=(n_blocks,),
            in_specs=[qkv_spec, w_spec, bias_spec],
            out_specs=[ctx_spec, proj_spec, proj_spec],
        ),
        compiler_params=pltpu.CompilerParams(
            dimension_semantics=("parallel",),
            vmem_limit_bytes=vmem_limit),
    )(qkv, w, bias)

    def unpack(y):   # (n_blocks, C, L) -> (B, C, N)
        C = y.shape[1]
        y = y.reshape(n_blocks, C, b_blk, N)
        return jnp.transpose(y, (0, 2, 1, 3)).reshape(B, C, N)

    return unpack(ctx_p), unpack(q_p), unpack(k_p)


def _reference(v, q, k, wq, wk, wv, mask, *, d_k, nhead):
    """Pure-JAX transcription of the PyTorch forward, for verification."""
    B = q.shape[0]
    d_h = d_k // nhead
    qp = jnp.transpose(q, (0, 2, 1)) @ wq.T   # (B, N, D)
    kp = jnp.transpose(k, (0, 2, 1)) @ wk.T
    vp = jnp.transpose(v, (0, 2, 1)) @ wv.T

    def heads(x):
        return jnp.transpose(x.reshape(B, -1, nhead, d_h), (0, 2, 3, 1))  # (B,H,dh,N)

    q_h, k_h, v_h = heads(qp), heads(kp), heads(vp)
    scores = jnp.einsum('bhin,bhjn->bhij', q_h, k_h) / math.sqrt(d_k)
    scores = jnp.where(mask == 0, -1e9, scores)
    attn = jax.nn.softmax(scores, axis=-1)
    ctx_h = jnp.einsum('bhij,bhjn->bhin', attn, v_h)              # (B,H,dh,N)
    ctx = jnp.transpose(ctx_h, (0, 3, 1, 2)).reshape(B, -1, d_k)  # (B,N,d_k)
    return (jnp.transpose(ctx, (0, 2, 1)),
            jnp.transpose(qp, (0, 2, 1)),
            jnp.transpose(kp, (0, 2, 1)))


if __name__ == "__main__":
    def run_case(B, d_model, d_k, nhead, N, seed):
        d_h = d_k // nhead
        key = jax.random.PRNGKey(seed)
        kv_, kq_, kk_, kwq, kwk, kwv = jax.random.split(key, 6)

        v_in = jax.random.normal(kv_, (B, d_model, N), dtype=jnp.float32)
        q_in = jax.random.normal(kq_, (B, d_model, N), dtype=jnp.float32)
        k_in = jax.random.normal(kk_, (B, d_model, N), dtype=jnp.float32)

        bound = 1.0 / math.sqrt(d_model)
        wq = jax.random.uniform(kwq, (d_model, d_model), jnp.float32, -bound, bound)
        wk = jax.random.uniform(kwk, (d_model, d_model), jnp.float32, -bound, bound)
        wv = jax.random.uniform(kwv, (d_model, d_model), jnp.float32, -bound, bound)

        # Deterministic (d_h, d_h) mask (lower-triangular), broadcast over
        # batch and heads exactly like the PyTorch masked_fill.
        mask = jnp.tril(jnp.ones((d_h, d_h), dtype=jnp.float32))

        ctx, q_out, k_out = self_attention_pallas(
            v_in, q_in, k_in, wq, wk, wv, mask, d_k=d_k, nhead=nhead)
        jax.block_until_ready((ctx, q_out, k_out))

        ctx_r, q_r, k_r = _reference(v_in, q_in, k_in, wq, wk, wv, mask,
                                     d_k=d_k, nhead=nhead)
        np.testing.assert_allclose(np.asarray(q_out), np.asarray(q_r),
                                   rtol=1e-5, atol=1e-5)
        np.testing.assert_allclose(np.asarray(k_out), np.asarray(k_r),
                                   rtol=1e-5, atol=1e-5)
        np.testing.assert_allclose(np.asarray(ctx), np.asarray(ctx_r),
                                   rtol=1e-4, atol=1e-4)

    # Small, module-consistent config (d_model == d_k is required by .view()).
    run_case(B=2, d_model=32, d_k=32, nhead=4, N=16, seed=0)
    # Second config exercising batch packing with a >=2-way parallel grid.
    run_case(B=4, d_model=64, d_k=64, nhead=4, N=128, seed=1)

    print("KERNEL_OK")
</pallas_src>

<mosaic_0001>
module attributes {stable_mosaic.version = 11 : i64} {
  func.func @_self_attention_kernel(%arg0: i32, %arg1: memref<1x3x32x32xf32, #tpu.memory_space<vmem>>, %arg2: memref<3x32x32xf32, #tpu.memory_space<vmem>>, %arg3: memref<32x32xf32, #tpu.memory_space<vmem>>, %arg4: memref<1x32x32xf32, #tpu.memory_space<vmem>>, %arg5: memref<1x32x32xf32, #tpu.memory_space<vmem>>, %arg6: memref<1x32x32xf32, #tpu.memory_space<vmem>>) attributes {dimension_semantics = [#tpu.dimension_semantics<parallel>], iteration_bounds = array<i64: 1>, scalar_prefetch = 0 : i64, scratch_operands = 0 : i64, tpu.core_type = #tpu.core_type<tc>, window_params = [{transform_indices = @transform_0, window_bounds = array<i64: 1, 3, 32, 32>}, {pipeline_mode = #tpu.pipeline_mode<synchronous>, transform_indices = @transform_1, window_bounds = array<i64: 3, 32, 32>}, {pipeline_mode = #tpu.pipeline_mode<synchronous>, transform_indices = @transform_2, window_bounds = array<i64: 32, 32>}, {transform_indices = @transform_3, window_bounds = array<i64: 1, 32, 32>}, {transform_indices = @transform_4, window_bounds = array<i64: 1, 32, 32>}, {transform_indices = @transform_5, window_bounds = array<i64: 1, 32, 32>}]} {
    %c0 = arith.constant 0 : index
    %c0_0 = arith.constant 0 : index
    %c0_1 = arith.constant 0 : index
    %c0_2 = arith.constant 0 : index
    %0 = vector.load %arg1[%c0, %c0_0, %c0_1, %c0_2] : memref<1x3x32x32xf32, #tpu.memory_space<vmem>>, vector<1x3x32x32xf32>
    %1 = vector.shape_cast %0 : vector<1x3x32x32xf32> to vector<3x32x32xf32>
    %c0_3 = arith.constant 0 : index
    %c0_4 = arith.constant 0 : index
    %c0_5 = arith.constant 0 : index
    %2 = vector.load %arg2[%c0_3, %c0_4, %c0_5] : memref<3x32x32xf32, #tpu.memory_space<vmem>>, vector<3x32x32xf32>
    %3 = vector.extract_strided_slice %1 {offsets = [0, 0, 0], sizes = [1, 32, 32], strides = [1, 1, 1]} : vector<3x32x32xf32> to vector<1x32x32xf32>
    %4 = vector.shape_cast %3 : vector<1x32x32xf32> to vector<32x32xf32>
    %5 = vector.extract_strided_slice %1 {offsets = [1, 0, 0], sizes = [1, 32, 32], strides = [1, 1, 1]} : vector<3x32x32xf32> to vector<1x32x32xf32>
    %6 = vector.shape_cast %5 : vector<1x32x32xf32> to vector<32x32xf32>
    %7 = vector.extract_strided_slice %1 {offsets = [2, 0, 0], sizes = [1, 32, 32], strides = [1, 1, 1]} : vector<3x32x32xf32> to vector<1x32x32xf32>
    %8 = vector.shape_cast %7 : vector<1x32x32xf32> to vector<32x32xf32>
    %9 = vector.extract_strided_slice %2 {offsets = [0, 0, 0], sizes = [1, 32, 32], strides = [1, 1, 1]} : vector<3x32x32xf32> to vector<1x32x32xf32>
    %10 = vector.shape_cast %9 : vector<1x32x32xf32> to vector<32x32xf32>
    %11 = vector.extract_strided_slice %2 {offsets = [1, 0, 0], sizes = [1, 32, 32], strides = [1, 1, 1]} : vector<3x32x32xf32> to vector<1x32x32xf32>
    %12 = vector.shape_cast %11 : vector<1x32x32xf32> to vector<32x32xf32>
    %13 = vector.extract_strided_slice %2 {offsets = [2, 0, 0], sizes = [1, 32, 32], strides = [1, 1, 1]} : vector<3x32x32xf32> to vector<1x32x32xf32>
    %14 = vector.shape_cast %13 : vector<1x32x32xf32> to vector<32x32xf32>
    %cst = arith.constant dense<0.000000e+00> : vector<32x32xf32>
    %15 = tpu.matmul %10, %4, %cst {dimension_numbers = #tpu.dot_dimension_numbers<[1], [0], [0], [1], [0, 0, 1, 1], [], []>} : vector<32x32xf32>, vector<32x32xf32>, vector<32x32xf32> -> vector<32x32xf32>
    %cst_6 = arith.constant dense<0.000000e+00> : vector<32x32xf32>
    %16 = tpu.matmul %12, %6, %cst_6 {dimension_numbers = #tpu.dot_dimension_numbers<[1], [0], [0], [1], [0, 0, 1, 1], [], []>} : vector<32x32xf32>, vector<32x32xf32>, vector<32x32xf32> -> vector<32x32xf32>
    %cst_7 = arith.constant dense<0.000000e+00> : vector<32x32xf32>
    %17 = tpu.matmul %14, %8, %cst_7 {dimension_numbers = #tpu.dot_dimension_numbers<[1], [0], [0], [1], [0, 0, 1, 1], [], []>} : vector<32x32xf32>, vector<32x32xf32>, vector<32x32xf32> -> vector<32x32xf32>
    %c0_8 = arith.constant 0 : index
    %c0_9 = arith.constant 0 : index
    %c0_10 = arith.constant 0 : index
    %18 = vector.load %arg5[%c0_8, %c0_9, %c0_10] : memref<1x32x32xf32, #tpu.memory_space<vmem>>, vector<1x32x32xf32>
    %19 = vector.shape_cast %18 : vector<1x32x32xf32> to vector<32x32xf32>
    %20 = vector.shape_cast %15 : vector<32x32xf32> to vector<1x32x32xf32>
    tpu.vector_store %arg5[%c0_8, %c0_9, %c0_10], %20 {strides = array<i32>} : memref<1x32x32xf32, #tpu.memory_space<vmem>>, vector<1x32x32xf32>,
    %c0_11 = arith.constant 0 : index
    %c0_12 = arith.constant 0 : index
    %c0_13 = arith.constant 0 : index
    %21 = vector.load %arg6[%c0_11, %c0_12, %c0_13] : memref<1x32x32xf32, #tpu.memory_space<vmem>>, vector<1x32x32xf32>
    %22 = vector.shape_cast %21 : vector<1x32x32xf32> to vector<32x32xf32>
    %23 = vector.shape_cast %16 : vector<32x32xf32> to vector<1x32x32xf32>
    tpu.vector_store %arg6[%c0_11, %c0_12, %c0_13], %23 {strides = array<i32>} : memref<1x32x32xf32, #tpu.memory_space<vmem>>, vector<1x32x32xf32>,
    %c0_14 = arith.constant 0 : index
    %c0_15 = arith.constant 0 : index
    %24 = vector.load %arg3[%c0_14, %c0_15] : memref<32x32xf32, #tpu.memory_space<vmem>>, vector<32x32xf32>
    %25 = vector.extract_strided_slice %15 {offsets = [0, 0], sizes = [32, 16], strides = [1, 1]} : vector<32x32xf32> to vector<32x16xf32>
    %26 = vector.extract_strided_slice %16 {offsets = [0, 0], sizes = [32, 16], strides = [1, 1]} : vector<32x32xf32> to vector<32x16xf32>
    %27 = vector.extract_strided_slice %17 {offsets = [0, 0], sizes = [32, 16], strides = [1, 1]} : vector<32x32xf32> to vector<32x16xf32>
    %cst_16 = arith.constant dense<0.000000e+00> : vector<32x32xf32>
    %28 = tpu.matmul %25, %26, %cst_16 {dimension_numbers = #tpu.dot_dimension_numbers<[1], [1], [0], [0], [0, 0, 1, 0], [], []>} : vector<32x16xf32>, vector<32x16xf32>, vector<32x32xf32> -> vector<32x32xf32>
    %cst_17 = arith.constant 0.176776692 : f32
    %29 = vector.broadcast %cst_17 : f32 to vector<32x32xf32>
    %30 = arith.mulf %28, %29 : vector<32x32xf32>
    %31 = arith.addf %30, %24 : vector<32x32xf32>
    %cst_18 = arith.constant dense<0xFF800000> : vector<32xf32>
    %32 = vector.multi_reduction <maximumf>, %31, %cst_18 [1] : vector<32x32xf32> to vector<32xf32>
    %33 = vector.shape_cast %32 : vector<32xf32> to vector<32x1xf32>
    %34 = vector.broadcast %33 : vector<32x1xf32> to vector<32x32xf32>
    %35 = arith.subf %31, %34 : vector<32x32xf32>
    %36 = math.exp %35 : vector<32x32xf32>
    %cst_19 = arith.constant dense<0.000000e+00> : vector<32xf32>
    %37 = vector.multi_reduction <add>, %36, %cst_19 [1] : vector<32x32xf32> to vector<32xf32>
    %38 = vector.shape_cast %37 : vector<32xf32> to vector<32x1xf32>
    %39 = tpu.reciprocal %38 : vector<32x1xf32> -> vector<32x1xf32>
    %40 = vector.broadcast %39 : vector<32x1xf32> to vector<32x32xf32>
    %41 = arith.mulf %36, %40 : vector<32x32xf32>
    %cst_20 = arith.constant dense<0.000000e+00> : vector<32x16xf32>
    %42 = tpu.matmul %41, %27, %cst_20 {dimension_numbers = #tpu.dot_dimension_numbers<[1], [0], [0], [1], [0, 0, 1, 1], [], []>} : vector<32x32xf32>, vector<32x16xf32>, vector<32x16xf32> -> vector<32x16xf32>
    %43 = vector.extract_strided_slice %15 {offsets = [0, 16], sizes = [32, 16], strides = [1, 1]} : vector<32x32xf32> to vector<32x16xf32>
    %44 = vector.extract_strided_slice %16 {offsets = [0, 16], sizes = [32, 16], strides = [1, 1]} : vector<32x32xf32> to vector<32x16xf32>
    %45 = vector.extract_strided_slice %17 {offsets = [0, 16], sizes = [32, 16], strides = [1, 1]} : vector<32x32xf32> to vector<32x16xf32>
    %cst_21 = arith.constant dense<0.000000e+00> : vector<32x32xf32>
    %46 = tpu.matmul %43, %44, %cst_21 {dimension_numbers = #tpu.dot_dimension_numbers<[1], [1], [0], [0], [0, 0, 1, 0], [], []>} : vector<32x16xf32>, vector<32x16xf32>, vector<32x32xf32> -> vector<32x32xf32>
    %cst_22 = arith.constant 0.176776692 : f32
    %47 = vector.broadcast %cst_22 : f32 to vector<32x32xf32>
    %48 = arith.mulf %46, %47 : vector<32x32xf32>
    %49 = arith.addf %48, %24 : vector<32x32xf32>
    %cst_23 = arith.constant dense<0xFF800000> : vector<32xf32>
    %50 = vector.multi_reduction <maximumf>, %49, %cst_23 [1] : vector<32x32xf32> to vector<32xf32>
    %51 = vector.shape_cast %50 : vector<32xf32> to vector<32x1xf32>
    %52 = vector.broadcast %51 : vector<32x1xf32> to vector<32x32xf32>
    %53 = arith.subf %49, %52 : vector<32x32xf32>
    %54 = math.exp %53 : vector<32x32xf32>
    %cst_24 = arith.constant dense<0.000000e+00> : vector<32xf32>
    %55 = vector.multi_reduction <add>, %54, %cst_24 [1] : vector<32x32xf32> to vector<32xf32>
    %56 = vector.shape_cast %55 : vector<32xf32> to vector<32x1xf32>
    %57 = tpu.reciprocal %56 : vector<32x1xf32> -> vector<32x1xf32>
    %58 = vector.broadcast %57 : vector<32x1xf32> to vector<32x32xf32>
    %59 = arith.mulf %54, %58 : vector<32x32xf32>
    %cst_25 = arith.constant dense<0.000000e+00> : vector<32x16xf32>
    %60 = tpu.matmul %59, %45, %cst_25 {dimension_numbers = #tpu.dot_dimension_numbers<[1], [0], [0], [1], [0, 0, 1, 1], [], []>} : vector<32x32xf32>, vector<32x16xf32>, vector<32x16xf32> -> vector<32x16xf32>
    %61 = tpu.concatenate %42, %60 in 1 : vector<32x16xf32>, vector<32x16xf32> -> vector<32x32xf32>
    %c0_26 = arith.constant 0 : index
    %c0_27 = arith.constant 0 : index
    %c0_28 = arith.constant 0 : index
    %62 = vector.load %arg4[%c0_26, %c0_27, %c0_28] : memref<1x32x32xf32, #tpu.memory_space<vmem>>, vector<1x32x32xf32>
    %63 = vector.shape_cast %62 : vector<1x32x32xf32> to vector<32x32xf32>
    %64 = vector.shape_cast %61 : vector<32x32xf32> to vector<1x32x32xf32>
    tpu.vector_store %arg4[%c0_26, %c0_27, %c0_28], %64 {strides = array<i32>} : memref<1x32x32xf32, #tpu.memory_space<vmem>>, vector<1x32x32xf32>,
    return
  }
  func.func @transform_0(%arg0: i32) -> (i32, i32, i32, i32) {
    %c0_i32 = arith.constant 0 : i32
    %c0_i32_0 = arith.constant 0 : i32
    %c0_i32_1 = arith.constant 0 : i32
    %c0_i32_2 = arith.constant 0 : i32
    return %arg0, %c0_i32, %c0_i32_0, %c0_i32_1 : i32, i32, i32, i32
  }
  func.func @transform_1(%arg0: i32) -> (i32, i32, i32) {
    %c0_i32 = arith.constant 0 : i32
    %c0_i32_0 = arith.constant 0 : i32
    %c0_i32_1 = arith.constant 0 : i32
    %c0_i32_2 = arith.constant 0 : i32
    return %c0_i32, %c0_i32_0, %c0_i32_1 : i32, i32, i32
  }
  func.func @transform_2(%arg0: i32) -> (i32, i32) {
    %c0_i32 = arith.constant 0 : i32
    %c0_i32_0 = arith.constant 0 : i32
    %c0_i32_1 = arith.constant 0 : i32
    return %c0_i32, %c0_i32_0 : i32, i32
  }
  func.func @transform_3(%arg0: i32) -> (i32, i32, i32) {
    %c0_i32 = arith.constant 0 : i32
    %c0_i32_0 = arith.constant 0 : i32
    %c0_i32_1 = arith.constant 0 : i32
    return %arg0, %c0_i32, %c0_i32_0 : i32, i32, i32
  }
  func.func @transform_4(%arg0: i32) -> (i32, i32, i32) {
    %c0_i32 = arith.constant 0 : i32
    %c0_i32_0 = arith.constant 0 : i32
    %c0_i32_1 = arith.constant 0 : i32
    return %arg0, %c0_i32, %c0_i32_0 : i32, i32, i32
  }
  func.func @transform_5(%arg0: i32) -> (i32, i32, i32) {
    %c0_i32 = arith.constant 0 : i32
    %c0_i32_0 = arith.constant 0 : i32
    %c0_i32_1 = arith.constant 0 : i32
    return %arg0, %c0_i32, %c0_i32_0 : i32, i32, i32
  }
}

</mosaic_0001>

<llo_original>
// kernel: tpu_custom_call.1
$region0: #{tpu_custom_call.1}
  #allocation0 [shape = 'u32[]', space=smem, size = 0x4, offset = 0x4, fixed_abs, tag = 'smem constant byte address 0x4 - core index']
  #allocation1 [shape = 'u32[144,128]{1,0:T(1,128)}', space=vmem, size = 0x12000, scoped, tag = 'internal scratch']
  %s0 = inlined_call_operand.hbm [shape: f32[1,3,32,32], index: 0, kind: input, shape index: {}]
  %s1 = inlined_call_operand.hbm [shape: f32[3,32,32], index: 1, kind: input, shape index: {}]
  %s2 = inlined_call_operand.hbm [shape: f32[32,32], index: 2, kind: input, shape index: {}]
  %s3 = inlined_call_operand.hbm [shape: f32[1,32,32], index: 3, kind: output, shape index: {0}]
  %s4 = inlined_call_operand.hbm [shape: f32[1,32,32], index: 4, kind: output, shape index: {1}]
  %s5 = inlined_call_operand.hbm [shape: f32[1,32,32], index: 5, kind: output, shape index: {2}]
  %6 = xla_tuple %s3, %s4, %s5
  %s7 = sld [smem:[#allocation0]]
  $region50: #{tpu_custom_call.1} parent=0
    _
  %s9 = ssub.s32 1, %s7
  %s10 = scalar_select 0, %s9, %s7
  $region1: #{tpu_custom_call.1} parent=0
    #allocation2 [shape = 'u8[49152]{0}', space=vmem, size = 0xc000, scoped, tag = 'input window, operand 0, single buffered']
    #allocation3 [shape = 's32[1]{0}', space=sflag, size = 0x4, scoped, tag = 'scoped memory for tpu_custom_call.1']
    #allocation4 [shape = 's32[1]{0}', space=sflag, size = 0x4, scoped, tag = 'scoped memory for tpu_custom_call.1']
    #allocation5 [shape = 'u8[49152]{0}', space=vmem, size = 0xc000, scoped, tag = 'input window, operand 1, single buffered']
    #allocation6 [shape = 's32[1]{0}', space=sflag, size = 0x4, scoped, tag = 'scoped memory for tpu_custom_call.1']
    #allocation7 [shape = 'u8[16384]{0}', space=vmem, size = 0x4000, scoped, tag = 'input window, operand 2, single buffered']
    #allocation8 [shape = 'u8[16384]{0}', space=vmem, size = 0x4000, scoped, tag = 'output window, operand 0, single buffered']
    #allocation9 [shape = 'u8[16384]{0}', space=vmem, size = 0x4000, scoped, tag = 'output window, operand 1, single buffered']
    #allocation10 [shape = 's32[1]{0}', space=sflag, size = 0x4, scoped, tag = 'scoped memory for tpu_custom_call.1']
    #allocation11 [shape = 'u8[16384]{0}', space=vmem, size = 0x4000, scoped, tag = 'output window, operand 2, single buffered']
    %11 = vsyncpa [#allocation3], 0
    %12 = vsyncpa [#allocation6], 0
    %13 = vsyncpa [#allocation4], 0
    %14 = vsyncpa [#allocation10], 0
    // Predicated region
    $region2: #{tpu_custom_call.1} parent=1 // pred_check
      _
    $region3: #{tpu_custom_call.1} parent=1 // pred_check_branch
      %16 = sbr.rel (0) target = $region5
    $region4: #{tpu_custom_call.1} parent=1 // pred_region
      %s18 = ssub.s32 1536, 1536
      %19 = vsyncadd [#allocation3], %s18
      %s20 = sshll.u32 [#allocation2], 4
      %s21 = int_to_ptr.vmem [resolvable:$true] %s20
      %26 = dma.hbm_to_vmem [thread:$0]  %s0, 1536, %s21, [#allocation3], 128, 128, 8
    $region5: #{tpu_custom_call.1} parent=1 // pred_fallthru
      _
    // Predicated region
    $region6: #{tpu_custom_call.1} parent=1 // pred_check
      _
    $region7: #{tpu_custom_call.1} parent=1 // pred_check_branch
      %28 = sbr.rel (0) target = $region9
    $region8: #{tpu_custom_call.1} parent=1 // pred_region
      %s30 = ssub.s32 1536, 1536
      %31 = vsyncadd [#allocation6], %s30
      %s32 = sshll.u32 [#allocation5], 4
      %s33 = int_to_ptr.vmem [resolvable:$true] %s32
      %38 = dma.hbm_to_vmem [thread:$0]  %s1, 1536, %s33, [#allocation6], 128, 128, 8
    $region9: #{tpu_custom_call.1} parent=1 // pred_fallthru
      _
    // Predicated region
    $region10: #{tpu_custom_call.1} parent=1 // pred_check
      _
    $region11: #{tpu_custom_call.1} parent=1 // pred_check_branch
      %40 = sbr.rel (0) target = $region13
    $region12: #{tpu_custom_call.1} parent=1 // pred_region
      %s42 = ssub.s32 512, 512
      %43 = vsyncadd [#allocation6], %s42
      %s44 = sshll.u32 [#allocation7], 4
      %s45 = int_to_ptr.vmem [resolvable:$true] %s44
      %50 = dma.hbm_to_vmem [thread:$0]  %s2, 512, %s45, [#allocation6], 128, 128, 8
    $region13: #{tpu_custom_call.1} parent=1 // pred_fallthru
      _
    // Predicated region
    $region14: #{tpu_custom_call.1} parent=1 // pred_check
      _
    $region15: #{tpu_custom_call.1} parent=1 // pred_check_branch
      %52 = sbr.rel (0) target = $region17
    $region16: #{tpu_custom_call.1} parent=1 // pred_region
      %53 = dma.done [#allocation3], 1536
    $region17: #{tpu_custom_call.1} parent=1 // pred_fallthru
      _
    // Predicated region
    $region18: #{tpu_custom_call.1} parent=1 // pred_check
      _
    $region19: #{tpu_custom_call.1} parent=1 // pred_check_branch
      %55 = sbr.rel (0) target = $region21
    $region20: #{tpu_custom_call.1} parent=1 // pred_region
      %56 = dma.done [#allocation6], 1536
    $region21: #{tpu_custom_call.1} parent=1 // pred_fallthru
      _
    // Predicated region
    $region22: #{tpu_custom_call.1} parent=1 // pred_check
      _
    $region23: #{tpu_custom_call.1} parent=1 // pred_check_branch
      %58 = sbr.rel (0) target = $region25
    $region24: #{tpu_custom_call.1} parent=1 // pred_region
      %59 = dma.done [#allocation6], 512
    $region25: #{tpu_custom_call.1} parent=1 // pred_fallthru
      _
    %v60 = vld [vmem:[#allocation2] sm:$0xff]
    %v61 = vld [vmem:[#allocation2 + $0x8] sm:$0xff]
    %v62 = vld [vmem:[#allocation2 + $0x10] sm:$0xff]
    %v63 = vld [vmem:[#allocation2 + $0x18] sm:$0xff]
    %v64 = vld [vmem:[#allocation2 + $0x20] sm:$0xff]
    %v65 = vld [vmem:[#allocation2 + $0x28] sm:$0xff]
    %v66 = vld [vmem:[#allocation2 + $0x30] sm:$0xff]
    %v67 = vld [vmem:[#allocation2 + $0x38] sm:$0xff]
    %v68 = vld [vmem:[#allocation2 + $0x40] sm:$0xff]
    %v69 = vld [vmem:[#allocation2 + $0x48] sm:$0xff]
    %v70 = vld [vmem:[#allocation2 + $0x50] sm:$0xff]
    %v71 = vld [vmem:[#allocation2 + $0x58] sm:$0xff]
    %v72 = vld [vmem:[#allocation5] sm:$0xff]
    %v73 = vld [vmem:[#allocation5 + $0x8] sm:$0xff]
    %v74 = vld [vmem:[#allocation5 + $0x10] sm:$0xff]
    %v75 = vld [vmem:[#allocation5 + $0x18] sm:$0xff]
    %v76 = vld [vmem:[#allocation5 + $0x20] sm:$0xff]
    %v77 = vld [vmem:[#allocation5 + $0x28] sm:$0xff]
    %v78 = vld [vmem:[#allocation5 + $0x30] sm:$0xff]
    %v79 = vld [vmem:[#allocation5 + $0x38] sm:$0xff]
    %v80 = vld [vmem:[#allocation5 + $0x40] sm:$0xff]
    %v81 = vld [vmem:[#allocation5 + $0x48] sm:$0xff]
    %v82 = vld [vmem:[#allocation5 + $0x50] sm:$0xff]
    %v83 = vld [vmem:[#allocation5 + $0x58] sm:$0xff]
    %vm84 = vcmask 261120
    %v86 = vsel %vm84, %v72, 0
    %v89 = vsel %vm84, %v73, 0
    %v92 = vsel %vm84, %v74, 0
    %v95 = vsel %vm84, %v75, 0
    %97 = vmatprep.subr.mxu0 0.0
    %98 = vmatpush1.msra.mxu0 %v60
    %99 = vmatprep.subr.mxu0 0.0
    %100 = vmatpush1.msra.mxu0 %v61
    %101 = vmatprep.subr.mxu0 0.0
    %102 = vmatpush1.msra.mxu0 %v62
    %103 = vmatprep.subr.mxu0 0.0
    %104 = vmatpush1.msra.mxu0 %v63
    %105 = vmatprep.subr.mxu0 0.0
    %106 = vmatpush1.msra.mxu0 0.0
    %107 = vmatprep.subr.mxu0 0.0
    %108 = vmatpush1.msra.mxu0 0.0
    %109 = vmatprep.subr.mxu0 0.0
    %110 = vmatpush1.msra.mxu0 0.0
    %111 = vmatprep.subr.mxu0 0.0
    %112 = vmatpush1.msra.mxu0 0.0
    %113 = vmatprep.subr.mxu0 0.0
    %114 = vmatpush1.msra.mxu0 0.0
    %115 = vmatprep.subr.mxu0 0.0
    %116 = vmatpush1.msra.mxu0 0.0
    %117 = vmatprep.subr.mxu0 0.0
    %118 = vmatpush1.msra.mxu0 0.0
    %119 = vmatprep.subr.mxu0 0.0
    %120 = vmatpush1.msra.mxu0 0.0
    %121 = vmatprep.subr.mxu0 0.0
    %122 = vmatpush1.msra.mxu0 0.0
    %123 = vmatprep.subr.mxu0 0.0
    %124 = vmatpush1.msra.mxu0 0.0
    %125 = vmatprep.subr.mxu0 0.0
    %126 = vmatpush1.msra.mxu0 0.0
    %127 = vmatprep.subr.mxu0 0.0
    %128 = vmatpush1.msra.mxu0 0.0
    %129 = vmatprep.subr.mxu0 0.0
    %130 = vmatpush1.msra.mxu0 0.0
    %131 = vmatprep.subr.mxu0 0.0
    %132 = vmatpush1.msra.mxu0 0.0
    %133 = vmatprep.subr.mxu0 0.0
    %134 = vmatpush1.msra.mxu0 0.0
    %135 = vmatprep.subr.mxu0 0.0
    %136 = vmatpush1.msra.mxu0 0.0
    %137 = vmatprep.subr.mxu0 0.0
    %138 = vmatpush1.msra.mxu0 0.0
    %139 = vmatprep.subr.mxu0 0.0
    %140 = vmatpush1.msra.mxu0 0.0
    %141 = vmatprep.subr.mxu0 0.0
    %142 = vmatpush1.msra.mxu0 0.0
    %143 = vmatprep.subr.mxu0 0.0
    %144 = vmatpush1.msra.mxu0 0.0
    %145 = vmatprep.subr.mxu0 0.0
    %146 = vmatpush1.msra.mxu0 0.0
    %147 = vmatprep.subr.mxu0 0.0
    %148 = vmatpush1.msra.mxu0 0.0
    %149 = vmatprep.subr.mxu0 0.0
    %150 = vmatpush1.msra.mxu0 0.0
    %151 = vmatprep.subr.mxu0 0.0
    %152 = vmatpush1.msra.mxu0 0.0
    %153 = vmatprep.subr.mxu0 0.0
    %154 = vmatpush1.msra.mxu0 0.0
    %155 = vmatprep.subr.mxu0 0.0
    %156 = vmatpush1.msra.mxu0 0.0
    %157 = vmatprep.subr.mxu0 0.0
    %158 = vmatpush1.msra.mxu0 0.0
    %159 = vmatprep.subr.mxu0 0.0
    %160 = vmatpush1.msra.mxu0 0.0
    %161 = vmatprep.mubr.f32.mxu0 0.0
    %162 = vmatmul.mubr.f32.gmra.mrb[0].mxu0 %v86
    %v163 = vpop.f32.mrb[0].mxu0
    %v164 = vadd.f32 0.0, %v163
    %v165 = vpop.f32.mrb[0].mxu0
    %166 = vmatprep.mubr.f32.mxu0 0.0
    %167 = vmatmul.mubr.f32.gmra.mrb[0].mxu0 %v89
    %v168 = vpop.f32.mrb[0].mxu0
    %v169 = vadd.f32 0.0, %v168
    %v170 = vpop.f32.mrb[0].mxu0
    %171 = vmatprep.mubr.f32.mxu0 0.0
    %172 = vmatmul.mubr.f32.gmra.mrb[0].mxu0 %v92
    %v173 = vpop.f32.mrb[0].mxu0
    %v174 = vadd.f32 0.0, %v173
    %v175 = vpop.f32.mrb[0].mxu0
    %176 = vmatprep.mubr.f32.mxu0 0.0
    %177 = vmatmul.mubr.f32.gmra.mrb[0].mxu0 %v95
    %v178 = vpop.f32.mrb[0].mxu0
    %v179 = vadd.f32 0.0, %v178
    %v180 = vpop.f32.mrb[0].mxu0
    %181 = vdwg.mxu0
    %v183 = vsel %vm84, %v76, 0
    %v186 = vsel %vm84, %v77, 0
    %v189 = vsel %vm84, %v78, 0
    %v192 = vsel %vm84, %v79, 0
    %194 = vmatprep.subr.mxu0 0.0
    %195 = vmatpush1.msra.mxu0 %v64
    %196 = vmatprep.subr.mxu0 0.0
    %197 = vmatpush1.msra.mxu0 %v65
    %198 = vmatprep.subr.mxu0 0.0
    %199 = vmatpush1.msra.mxu0 %v66
    %200 = vmatprep.subr.mxu0 0.0
    %201 = vmatpush1.msra.mxu0 %v67
    %202 = vmatprep.subr.mxu0 0.0
    %203 = vmatpush1.msra.mxu0 0.0
    %204 = vmatprep.subr.mxu0 0.0
    %205 = vmatpush1.msra.mxu0 0.0
    %206 = vmatprep.subr.mxu0 0.0
    %207 = vmatpush1.msra.mxu0 0.0
    %208 = vmatprep.subr.mxu0 0.0
    %209 = vmatpush1.msra.mxu0 0.0
    %210 = vmatprep.subr.mxu0 0.0
    %211 = vmatpush1.msra.mxu0 0.0
    %212 = vmatprep.subr.mxu0 0.0
    %213 = vmatpush1.msra.mxu0 0.0
    %214 = vmatprep.subr.mxu0 0.0
    %215 = vmatpush1.msra.mxu0 0.0
    %216 = vmatprep.subr.mxu0 0.0
    %217 = vmatpush1.msra.mxu0 0.0
    %218 = vmatprep.subr.mxu0 0.0
    %219 = vmatpush1.msra.mxu0 0.0
    %220 = vmatprep.subr.mxu0 0.0
    %221 = vmatpush1.msra.mxu0 0.0
    %222 = vmatprep.subr.mxu0 0.0
    %223 = vmatpush1.msra.mxu0 0.0
    %224 = vmatprep.subr.mxu0 0.0
    %225 = vmatpush1.msra.mxu0 0.0
    %226 = vmatprep.subr.mxu0 0.0
    %227 = vmatpush1.msra.mxu0 0.0
    %228 = vmatprep.subr.mxu0 0.0
    %229 = vmatpush1.msra.mxu0 0.0
    %230 = vmatprep.subr.mxu0 0.0
    %231 = vmatpush1.msra.mxu0 0.0
    %232 = vmatprep.subr.mxu0 0.0
    %233 = vmatpush1.msra.mxu0 0.0
    %234 = vmatprep.subr.mxu0 0.0
    %235 = vmatpush1.msra.mxu0 0.0
    %236 = vmatprep.subr.mxu0 0.0
    %237 = vmatpush1.msra.mxu0 0.0
    %238 = vmatprep.subr.mxu0 0.0
    %239 = vmatpush1.msra.mxu0 0.0
    %240 = vmatprep.subr.mxu0 0.0
    %241 = vmatpush1.msra.mxu0 0.0
    %242 = vmatprep.subr.mxu0 0.0
    %243 = vmatpush1.msra.mxu0 0.0
    %244 = vmatprep.subr.mxu0 0.0
    %245 = vmatpush1.msra.mxu0 0.0
    %246 = vmatprep.subr.mxu0 0.0
    %247 = vmatpush1.msra.mxu0 0.0
    %248 = vmatprep.subr.mxu0 0.0
    %249 = vmatpush1.msra.mxu0 0.0
    %250 = vmatprep.subr.mxu0 0.0
    %251 = vmatpush1.msra.mxu0 0.0
    %252 = vmatprep.subr.mxu0 0.0
    %253 = vmatpush1.msra.mxu0 0.0
    %254 = vmatprep.subr.mxu0 0.0
    %255 = vmatpush1.msra.mxu0 0.0
    %256 = vmatprep.subr.mxu0 0.0
    %257 = vmatpush1.msra.mxu0 0.0
    %258 = vmatprep.mubr.f32.mxu0 0.0
    %259 = vmatmul.mubr.f32.gmra.mrb[0].mxu0 %v183
    %v260 = vpop.f32.mrb[0].mxu0
    %v261 = vadd.f32 0.0, %v260
    %v262 = vpop.f32.mrb[0].mxu0
    %263 = vmatprep.mubr.f32.mxu0 0.0
    %264 = vmatmul.mubr.f32.gmra.mrb[0].mxu0 %v186
    %v265 = vpop.f32.mrb[0].mxu0
    %v266 = vadd.f32 0.0, %v265
    %v267 = vpop.f32.mrb[0].mxu0
    %268 = vmatprep.mubr.f32.mxu0 0.0
    %269 = vmatmul.mubr.f32.gmra.mrb[0].mxu0 %v189
    %v270 = vpop.f32.mrb[0].mxu0
    %v271 = vadd.f32 0.0, %v270
    %v272 = vpop.f32.mrb[0].mxu0
    %273 = vmatprep.mubr.f32.mxu0 0.0
    %274 = vmatmul.mubr.f32.gmra.mrb[0].mxu0 %v192
    %v275 = vpop.f32.mrb[0].mxu0
    %v276 = vadd.f32 0.0, %v275
    %v277 = vpop.f32.mrb[0].mxu0
    %278 = vdwg.mxu0
    %v280 = vsel %vm84, %v80, 0
    %v283 = vsel %vm84, %v81, 0
    %v286 = vsel %vm84, %v82, 0
    %v289 = vsel %vm84, %v83, 0
    %291 = vmatprep.subr.mxu0 0.0
    %292 = vmatpush1.msra.mxu0 %v68
    %293 = vmatprep.subr.mxu0 0.0
    %294 = vmatpush1.msra.mxu0 %v69
    %295 = vmatprep.subr.mxu0 0.0
    %296 = vmatpush1.msra.mxu0 %v70
    %297 = vmatprep.subr.mxu0 0.0
    %298 = vmatpush1.msra.mxu0 %v71
    %299 = vmatprep.subr.mxu0 0.0
    %300 = vmatpush1.msra.mxu0 0.0
    %301 = vmatprep.subr.mxu0 0.0
    %302 = vmatpush1.msra.mxu0 0.0
    %303 = vmatprep.subr.mxu0 0.0
    %304 = vmatpush1.msra.mxu0 0.0
    %305 = vmatprep.subr.mxu0 0.0
    %306 = vmatpush1.msra.mxu0 0.0
    %307 = vmatprep.subr.mxu0 0.0
    %308 = vmatpush1.msra.mxu0 0.0
    %309 = vmatprep.subr.mxu0 0.0
    %310 = vmatpush1.msra.mxu0 0.0
    %311 = vmatprep.subr.mxu0 0.0
    %312 = vmatpush1.msra.mxu0 0.0
    %313 = vmatprep.subr.mxu0 0.0
    %314 = vmatpush1.msra.mxu0 0.0
    %315 = vmatprep.subr.mxu0 0.0
    %316 = vmatpush1.msra.mxu0 0.0
    %317 = vmatprep.subr.mxu0 0.0
    %318 = vmatpush1.msra.mxu0 0.0
    %319 = vmatprep.subr.mxu0 0.0
    %320 = vmatpush1.msra.mxu0 0.0
    %321 = vmatprep.subr.mxu0 0.0
    %322 = vmatpush1.msra.mxu0 0.0
    %323 = vmatprep.subr.mxu0 0.0
    %324 = vmatpush1.msra.mxu0 0.0
    %325 = vmatprep.subr.mxu0 0.0
    %326 = vmatpush1.msra.mxu0 0.0
    %327 = vmatprep.subr.mxu0 0.0
    %328 = vmatpush1.msra.mxu0 0.0
    %329 = vmatprep.subr.mxu0 0.0
    %330 = vmatpush1.msra.mxu0 0.0
    %331 = vmatprep.subr.mxu0 0.0
    %332 = vmatpush1.msra.mxu0 0.0
    %333 = vmatprep.subr.mxu0 0.0
    %334 = vmatpush1.msra.mxu0 0.0
    %335 = vmatprep.subr.mxu0 0.0
    %336 = vmatpush1.msra.mxu0 0.0
    %337 = vmatprep.subr.mxu0 0.0
    %338 = vmatpush1.msra.mxu0 0.0
    %339 = vmatprep.subr.mxu0 0.0
    %340 = vmatpush1.msra.mxu0 0.0
    %341 = vmatprep.subr.mxu0 0.0
    %342 = vmatpush1.msra.mxu0 0.0
    %343 = vmatprep.subr.mxu0 0.0
    %344 = vmatpush1.msra.mxu0 0.0
    %345 = vmatprep.subr.mxu0 0.0
    %346 = vmatpush1.msra.mxu0 0.0
    %347 = vmatprep.subr.mxu0 0.0
    %348 = vmatpush1.msra.mxu0 0.0
    %349 = vmatprep.subr.mxu0 0.0
    %350 = vmatpush1.msra.mxu0 0.0
    %351 = vmatprep.subr.mxu0 0.0
    %352 = vmatpush1.msra.mxu0 0.0
    %353 = vmatprep.subr.mxu0 0.0
    %354 = vmatpush1.msra.mxu0 0.0
    %355 = vmatprep.mubr.f32.mxu0 0.0
    %356 = vmatmul.mubr.f32.gmra.mrb[0].mxu0 %v280
    %v357 = vpop.f32.mrb[0].mxu0
    %v358 = vadd.f32 0.0, %v357
    %v359 = vpop.f32.mrb[0].mxu0
    %360 = vmatprep.mubr.f32.mxu0 0.0
    %361 = vmatmul.mubr.f32.gmra.mrb[0].mxu0 %v283
    %v362 = vpop.f32.mrb[0].mxu0
    %v363 = vadd.f32 0.0, %v362
    %v364 = vpop.f32.mrb[0].mxu0
    %365 = vmatprep.mubr.f32.mxu0 0.0
    %366 = vmatmul.mubr.f32.gmra.mrb[0].mxu0 %v286
    %v367 = vpop.f32.mrb[0].mxu0
    %v368 = vadd.f32 0.0, %v367
    %v369 = vpop.f32.mrb[0].mxu0
    %370 = vmatprep.mubr.f32.mxu0 0.0
    %371 = vmatmul.mubr.f32.gmra.mrb[0].mxu0 %v289
    %v372 = vpop.f32.mrb[0].mxu0
    %v373 = vadd.f32 0.0, %v372
    %v374 = vpop.f32.mrb[0].mxu0
    %375 = vdwg.mxu0
    %376 = vst.msk [vmem:[#allocation9] sm:$0xff] %vm84, %v164
    %377 = vst.msk [vmem:[#allocation9 + $0x8] sm:$0xff] %vm84, %v169
    %378 = vst.msk [vmem:[#allocation9 + $0x10] sm:$0xff] %vm84, %v174
    %379 = vst.msk [vmem:[#allocation9 + $0x18] sm:$0xff] %vm84, %v179
    %380 = vst.msk [vmem:[#allocation11] sm:$0xff] %vm84, %v261
    %381 = vst.msk [vmem:[#allocation11 + $0x8] sm:$0xff] %vm84, %v266
    %382 = vst.msk [vmem:[#allocation11 + $0x10] sm:$0xff] %vm84, %v271
    %383 = vst.msk [vmem:[#allocation11 + $0x18] sm:$0xff] %vm84, %v276
    %v384 = vld [vmem:[#allocation7] sm:$0xff]
    %v385 = vld [vmem:[#allocation7 + $0x8] sm:$0xff]
    %v386 = vld [vmem:[#allocation7 + $0x10] sm:$0xff]
    %v387 = vld [vmem:[#allocation7 + $0x18] sm:$0xff]
    %vm388 = vcmask 130048
    %v390 = vsel %vm388, %v164, 0
    %v393 = vsel %vm388, %v169, 0
    %v396 = vsel %vm388, %v174, 0
    %v399 = vsel %vm388, %v179, 0
    %v402 = vsel %vm388, %v261, 0
    %v405 = vsel %vm388, %v266, 0
    %v408 = vsel %vm388, %v271, 0
    %v411 = vsel %vm388, %v276, 0
    %413 = vmatprep.subr.mxu0 0.0
    %414 = vmatpush1.xpose.msra.mxu0 %v402
    %415 = vmatprep.subr.mxu0 0.0
    %416 = vmatpush1.xpose.msra.mxu0 %v405
    %417 = vmatprep.subr.mxu0 0.0
    %418 = vmatpush1.xpose.msra.mxu0 %v408
    %419 = vmatprep.subr.mxu0 0.0
    %420 = vmatpush1.xpose.msra.mxu0 %v411
    %421 = vmatprep.subr.mxu0 0.0
    %422 = vmatpush1.xpose.msra.mxu0 0.0
    %423 = vmatprep.subr.mxu0 0.0
    %424 = vmatpush1.xpose.msra.mxu0 0.0
    %425 = vmatprep.subr.mxu0 0.0
    %426 = vmatpush1.xpose.msra.mxu0 0.0
    %427 = vmatprep.subr.mxu0 0.0
    %428 = vmatpush1.xpose.msra.mxu0 0.0
    %429 = vmatprep.subr.mxu0 0.0
    %430 = vmatpush1.xpose.msra.mxu0 0.0
    %431 = vmatprep.subr.mxu0 0.0
    %432 = vmatpush1.xpose.msra.mxu0 0.0
    %433 = vmatprep.subr.mxu0 0.0
    %434 = vmatpush1.xpose.msra.mxu0 0.0
    %435 = vmatprep.subr.mxu0 0.0
    %436 = vmatpush1.xpose.msra.mxu0 0.0
    %437 = vmatprep.subr.mxu0 0.0
    %438 = vmatpush1.xpose.msra.mxu0 0.0
    %439 = vmatprep.subr.mxu0 0.0
    %440 = vmatpush1.xpose.msra.mxu0 0.0
    %441 = vmatprep.subr.mxu0 0.0
    %442 = vmatpush1.xpose.msra.mxu0 0.0
    %443 = vmatprep.subr.mxu0 0.0
    %444 = vmatpush1.xpose.msra.mxu0 0.0
    %445 = vmatprep.subr.mxu0 0.0
    %446 = vmatpush1.xpose.msra.mxu0 0.0
    %447 = vmatprep.subr.mxu0 0.0
    %448 = vmatpush1.xpose.msra.mxu0 0.0
    %449 = vmatprep.subr.mxu0 0.0
    %450 = vmatpush1.xpose.msra.mxu0 0.0
    %451 = vmatprep.subr.mxu0 0.0
    %452 = vmatpush1.xpose.msra.mxu0 0.0
    %453 = vmatprep.subr.mxu0 0.0
    %454 = vmatpush1.xpose.msra.mxu0 0.0
    %455 = vmatprep.subr.mxu0 0.0
    %456 = vmatpush1.xpose.msra.mxu0 0.0
    %457 = vmatprep.subr.mxu0 0.0
    %458 = vmatpush1.xpose.msra.mxu0 0.0
    %459 = vmatprep.subr.mxu0 0.0
    %460 = vmatpush1.xpose.msra.mxu0 0.0
    %461 = vmatprep.subr.mxu0 0.0
    %462 = vmatpush1.xpose.msra.mxu0 0.0
    %463 = vmatprep.subr.mxu0 0.0
    %464 = vmatpush1.xpose.msra.mxu0 0.0
    %465 = vmatprep.subr.mxu0 0.0
    %466 = vmatpush1.xpose.msra.mxu0 0.0
    %467 = vmatprep.subr.mxu0 0.0
    %468 = vmatpush1.xpose.msra.mxu0 0.0
    %469 = vmatprep.subr.mxu0 0.0
    %470 = vmatpush1.xpose.msra.mxu0 0.0
    %471 = vmatprep.subr.mxu0 0.0
    %472 = vmatpush1.xpose.msra.mxu0 0.0
    %473 = vmatprep.subr.mxu0 0.0
    %474 = vmatpush1.xpose.msra.mxu0 0.0
    %475 = vmatprep.subr.mxu0 0.0
    %476 = vmatpush1.xpose.msra.mxu0 0.0
    %477 = vmatprep.mubr.f32.mxu0 0.0
    %478 = vmatmul.mubr.f32.gmra.mrb[0].mxu0 %v390
    %v479 = vpop.f32.mrb[0].mxu0
    %v480 = vadd.f32 0.0, %v479
    %v481 = vpop.f32.mrb[0].mxu0
    %482 = vmatprep.mubr.f32.mxu0 0.0
    %483 = vmatmul.mubr.f32.gmra.mrb[0].mxu0 %v393
    %v484 = vpop.f32.mrb[0].mxu0
    %v485 = vadd.f32 0.0, %v484
    %v486 = vpop.f32.mrb[0].mxu0
    %487 = vmatprep.mubr.f32.mxu0 0.0
    %488 = vmatmul.mubr.f32.gmra.mrb[0].mxu0 %v396
    %v489 = vpop.f32.mrb[0].mxu0
    %v490 = vadd.f32 0.0, %v489
    %v491 = vpop.f32.mrb[0].mxu0
    %492 = vmatprep.mubr.f32.mxu0 0.0
    %493 = vmatmul.mubr.f32.gmra.mrb[0].mxu0 %v399
    %v494 = vpop.f32.mrb[0].mxu0
    %v495 = vadd.f32 0.0, %v494
    %v496 = vpop.f32.mrb[0].mxu0
    %497 = vdwg.mxu0
    %v498 = vmul.f32 %v480, 0.17677669
    %v499 = vmul.f32 %v485, 0.17677669
    %v500 = vmul.f32 %v490, 0.17677669
    %v501 = vmul.f32 %v495, 0.17677669
    %v502 = vadd.f32 %v498, %v384
    %v503 = vadd.f32 %v499, %v385
    %v504 = vadd.f32 %v500, %v386
    %v505 = vadd.f32 %v501, %v387
    %v506 = vsel %vm84, %v502, -inf
    %507 = vmax.xlane.f32.xlu0 %v506
    %v508 = vpop.xlane.xlu0 %507
    %v509 = vsel %vm84, %v503, -inf
    %510 = vmax.xlane.f32.xlu0 %v509
    %v511 = vpop.xlane.xlu0 %510
    %v512 = vsel %vm84, %v504, -inf
    %513 = vmax.xlane.f32.xlu0 %v512
    %v514 = vpop.xlane.xlu0 %513
    %v515 = vsel %vm84, %v505, -inf
    %516 = vmax.xlane.f32.xlu0 %v515
    %v517 = vpop.xlane.xlu0 %516
    %v518 = vsub.f32 %v502, %v508
    %v519 = vsub.f32 %v503, %v511
    %v520 = vsub.f32 %v504, %v514
    %v521 = vsub.f32 %v505, %v517
    %v522 = vmul.f32 %v518, 1.442695
    %v523 = vpow.pop %v522
    %v524 = vmul.f32 %v519, 1.442695
    %v525 = vpow.pop %v524
    %v526 = vmul.f32 %v520, 1.442695
    %v527 = vpow.pop %v526
    %v528 = vmul.f32 %v521, 1.442695
    %v529 = vpow.pop %v528
    %v530 = vsel %vm84, %v523, 0.0
    %531 = vadd.xlane.f32.xlu0 %v530
    %v532 = vpop.xlane.xlu0 %531
    %v533 = vsel %vm84, %v525, 0.0
    %534 = vadd.xlane.f32.xlu0 %v533
    %v535 = vpop.xlane.xlu0 %534
    %v536 = vsel %vm84, %v527, 0.0
    %537 = vadd.xlane.f32.xlu0 %v536
    %v538 = vpop.xlane.xlu0 %537
    %v539 = vsel %vm84, %v529, 0.0
    %540 = vadd.xlane.f32.xlu0 %v539
    %v541 = vpop.xlane.xlu0 %540
    %v542 = vrcp.pop %v532
    %v543 = vrcp.pop %v535
    %v544 = vrcp.pop %v538
    %v545 = vrcp.pop %v541
    %v546 = vmul.f32 %v523, %v542
    %v547 = vmul.f32 %v525, %v543
    %v548 = vmul.f32 %v527, %v544
    %v549 = vmul.f32 %v529, %v545
    %v551 = vsel %vm84, %v546, 0
    %v554 = vsel %vm84, %v547, 0
    %v557 = vsel %vm84, %v548, 0
    %v560 = vsel %vm84, %v549, 0
    %562 = vmatprep.subr.mxu0 0.0
    %563 = vmatpush1.msra.mxu0 %v358
    %564 = vmatprep.subr.mxu0 0.0
    %565 = vmatpush1.msra.mxu0 %v363
    %566 = vmatprep.subr.mxu0 0.0
    %567 = vmatpush1.msra.mxu0 %v368
    %568 = vmatprep.subr.mxu0 0.0
    %569 = vmatpush1.msra.mxu0 %v373
    %570 = vmatprep.subr.mxu0 0.0
    %571 = vmatpush1.msra.mxu0 0.0
    %572 = vmatprep.subr.mxu0 0.0
    %573 = vmatpush1.msra.mxu0 0.0
    %574 = vmatprep.subr.mxu0 0.0
    %575 = vmatpush1.msra.mxu0 0.0
    %576 = vmatprep.subr.mxu0 0.0
    %577 = vmatpush1.msra.mxu0 0.0
    %578 = vmatprep.subr.mxu0 0.0
    %579 = vmatpush1.msra.mxu0 0.0
    %580 = vmatprep.subr.mxu0 0.0
    %581 = vmatpush1.msra.mxu0 0.0
    %582 = vmatprep.subr.mxu0 0.0
    %583 = vmatpush1.msra.mxu0 0.0
    %584 = vmatprep.subr.mxu0 0.0
    %585 = vmatpush1.msra.mxu0 0.0
    %586 = vmatprep.subr.mxu0 0.0
    %587 = vmatpush1.msra.mxu0 0.0
    %588 = vmatprep.subr.mxu0 0.0
    %589 = vmatpush1.msra.mxu0 0.0
    %590 = vmatprep.subr.mxu0 0.0
    %591 = vmatpush1.msra.mxu0 0.0
    %592 = vmatprep.subr.mxu0 0.0
    %593 = vmatpush1.msra.mxu0 0.0
    %594 = vmatprep.subr.mxu0 0.0
    %595 = vmatpush1.msra.mxu0 0.0
    %596 = vmatprep.subr.mxu0 0.0
    %597 = vmatpush1.msra.mxu0 0.0
    %598 = vmatprep.subr.mxu0 0.0
    %599 = vmatpush1.msra.mxu0 0.0
    %600 = vmatprep.subr.mxu0 0.0
    %601 = vmatpush1.msra.mxu0 0.0
    %602 = vmatprep.subr.mxu0 0.0
    %603 = vmatpush1.msra.mxu0 0.0
    %604 = vmatprep.subr.mxu0 0.0
    %605 = vmatpush1.msra.mxu0 0.0
    %606 = vmatprep.subr.mxu0 0.0
    %607 = vmatpush1.msra.mxu0 0.0
    %608 = vmatprep.subr.mxu0 0.0
    %609 = vmatpush1.msra.mxu0 0.0
    %610 = vmatprep.subr.mxu0 0.0
    %611 = vmatpush1.msra.mxu0 0.0
    %612 = vmatprep.subr.mxu0 0.0
    %613 = vmatpush1.msra.mxu0 0.0
    %614 = vmatprep.subr.mxu0 0.0
    %615 = vmatpush1.msra.mxu0 0.0
    %616 = vmatprep.subr.mxu0 0.0
    %617 = vmatpush1.msra.mxu0 0.0
    %618 = vmatprep.subr.mxu0 0.0
    %619 = vmatpush1.msra.mxu0 0.0
    %620 = vmatprep.subr.mxu0 0.0
    %621 = vmatpush1.msra.mxu0 0.0
    %622 = vmatprep.subr.mxu0 0.0
    %623 = vmatpush1.msra.mxu0 0.0
    %624 = vmatprep.subr.mxu0 0.0
    %625 = vmatpush1.msra.mxu0 0.0
    %626 = vmatprep.mubr.f32.mxu0 0.0
    %627 = vmatmul.mubr.f32.gmra.mrb[0].mxu0 %v551
    %v628 = vpop.f32.mrb[0].mxu0
    %v629 = vadd.f32 0.0, %v628
    %v630 = vpop.f32.mrb[0].mxu0
    %631 = vmatprep.mubr.f32.mxu0 0.0
    %632 = vmatmul.mubr.f32.gmra.mrb[0].mxu0 %v554
    %v633 = vpop.f32.mrb[0].mxu0
    %v634 = vadd.f32 0.0, %v633
    %v635 = vpop.f32.mrb[0].mxu0
    %636 = vmatprep.mubr.f32.mxu0 0.0
    %637 = vmatmul.mubr.f32.gmra.mrb[0].mxu0 %v557
    %v638 = vpop.f32.mrb[0].mxu0
    %v639 = vadd.f32 0.0, %v638
    %v640 = vpop.f32.mrb[0].mxu0
    %641 = vmatprep.mubr.f32.mxu0 0.0
    %642 = vmatmul.mubr.f32.gmra.mrb[0].mxu0 %v560
    %v643 = vpop.f32.mrb[0].mxu0
    %v644 = vadd.f32 0.0, %v643
    %v645 = vpop.f32.mrb[0].mxu0
    %646 = vdwg.mxu0
    %647 = vrot.lane.b32.xlu0 %v164, 112
    %v648 = vpop.permute.xlu0 %647
    %649 = vrot.lane.b32.xlu0 %v169, 112
    %v650 = vpop.permute.xlu0 %649
    %651 = vrot.lane.b32.xlu0 %v174, 112
    %v652 = vpop.permute.xlu0 %651
    %653 = vrot.lane.b32.xlu0 %v179, 112
    %v654 = vpop.permute.xlu0 %653
    %655 = vrot.lane.b32.xlu0 %v261, 112
    %v656 = vpop.permute.xlu0 %655
    %657 = vrot.lane.b32.xlu0 %v266, 112
    %v658 = vpop.permute.xlu0 %657
    %659 = vrot.lane.b32.xlu0 %v271, 112
    %v660 = vpop.permute.xlu0 %659
    %661 = vrot.lane.b32.xlu0 %v276, 112
    %v662 = vpop.permute.xlu0 %661
    %v663 = vsel %vm388, %v648, 0
    %v665 = vsel %vm388, %v650, 0
    %v667 = vsel %vm388, %v652, 0
    %v669 = vsel %vm388, %v654, 0
    %v671 = vsel %vm388, %v656, 0
    %v673 = vsel %vm388, %v658, 0
    %v675 = vsel %vm388, %v660, 0
    %v677 = vsel %vm388, %v662, 0
    %679 = vmatprep.subr.mxu0 0.0
    %680 = vmatpush1.xpose.msra.mxu0 %v671
    %681 = vmatprep.subr.mxu0 0.0
    %682 = vmatpush1.xpose.msra.mxu0 %v673
    %683 = vmatprep.subr.mxu0 0.0
    %684 = vmatpush1.xpose.msra.mxu0 %v675
    %685 = vmatprep.subr.mxu0 0.0
    %686 = vmatpush1.xpose.msra.mxu0 %v677
    %687 = vmatprep.subr.mxu0 0.0
    %688 = vmatpush1.xpose.msra.mxu0 0.0
    %689 = vmatprep.subr.mxu0 0.0
    %690 = vmatpush1.xpose.msra.mxu0 0.0
    %691 = vmatprep.subr.mxu0 0.0
    %692 = vmatpush1.xpose.msra.mxu0 0.0
    %693 = vmatprep.subr.mxu0 0.0
    %694 = vmatpush1.xpose.msra.mxu0 0.0
    %695 = vmatprep.subr.mxu0 0.0
    %696 = vmatpush1.xpose.msra.mxu0 0.0
    %697 = vmatprep.subr.mxu0 0.0
    %698 = vmatpush1.xpose.msra.mxu0 0.0
    %699 = vmatprep.subr.mxu0 0.0
    %700 = vmatpush1.xpose.msra.mxu0 0.0
    %701 = vmatprep.subr.mxu0 0.0
    %702 = vmatpush1.xpose.msra.mxu0 0.0
    %703 = vmatprep.subr.mxu0 0.0
    %704 = vmatpush1.xpose.msra.mxu0 0.0
    %705 = vmatprep.subr.mxu0 0.0
    %706 = vmatpush1.xpose.msra.mxu0 0.0
    %707 = vmatprep.subr.mxu0 0.0
    %708 = vmatpush1.xpose.msra.mxu0 0.0
    %709 = vmatprep.subr.mxu0 0.0
    %710 = vmatpush1.xpose.msra.mxu0 0.0
    %711 = vmatprep.subr.mxu0 0.0
    %712 = vmatpush1.xpose.msra.mxu0 0.0
    %713 = vmatprep.subr.mxu0 0.0
    %714 = vmatpush1.xpose.msra.mxu0 0.0
    %715 = vmatprep.subr.mxu0 0.0
    %716 = vmatpush1.xpose.msra.mxu0 0.0
    %717 = vmatprep.subr.mxu0 0.0
    %718 = vmatpush1.xpose.msra.mxu0 0.0
    %719 = vmatprep.subr.mxu0 0.0
    %720 = vmatpush1.xpose.msra.mxu0 0.0
    %721 = vmatprep.subr.mxu0 0.0
    %722 = vmatpush1.xpose.msra.mxu0 0.0
    %723 = vmatprep.subr.mxu0 0.0
    %724 = vmatpush1.xpose.msra.mxu0 0.0
    %725 = vmatprep.subr.mxu0 0.0
    %726 = vmatpush1.xpose.msra.mxu0 0.0
    %727 = vmatprep.subr.mxu0 0.0
    %728 = vmatpush1.xpose.msra.mxu0 0.0
    %729 = vmatprep.subr.mxu0 0.0
    %730 = vmatpush1.xpose.msra.mxu0 0.0
    %731 = vmatprep.subr.mxu0 0.0
    %732 = vmatpush1.xpose.msra.mxu0 0.0
    %733 = vmatprep.subr.mxu0 0.0
    %734 = vmatpush1.xpose.msra.mxu0 0.0
    %735 = vmatprep.subr.mxu0 0.0
    %736 = vmatpush1.xpose.msra.mxu0 0.0
    %737 = vmatprep.subr.mxu0 0.0
    %738 = vmatpush1.xpose.msra.mxu0 0.0
    %739 = vmatprep.subr.mxu0 0.0
    %740 = vmatpush1.xpose.msra.mxu0 0.0
    %741 = vmatprep.subr.mxu0 0.0
    %742 = vmatpush1.xpose.msra.mxu0 0.0
    %743 = vmatprep.mubr.f32.mxu0 0.0
    %744 = vmatmul.mubr.f32.gmra.mrb[0].mxu0 %v663
    %v745 = vpop.f32.mrb[0].mxu0
    %v746 = vadd.f32 0.0, %v745
    %v747 = vpop.f32.mrb[0].mxu0
    %748 = vmatprep.mubr.f32.mxu0 0.0
    %749 = vmatmul.mubr.f32.gmra.mrb[0].mxu0 %v665
    %v750 = vpop.f32.mrb[0].mxu0
    %v751 = vadd.f32 0.0, %v750
    %v752 = vpop.f32.mrb[0].mxu0
    %753 = vmatprep.mubr.f32.mxu0 0.0
    %754 = vmatmul.mubr.f32.gmra.mrb[0].mxu0 %v667
    %v755 = vpop.f32.mrb[0].mxu0
    %v756 = vadd.f32 0.0, %v755
    %v757 = vpop.f32.mrb[0].mxu0
    %758 = vmatprep.mubr.f32.mxu0 0.0
    %759 = vmatmul.mubr.f32.gmra.mrb[0].mxu0 %v669
    %v760 = vpop.f32.mrb[0].mxu0
    %v761 = vadd.f32 0.0, %v760
    %v762 = vpop.f32.mrb[0].mxu0
    %763 = vdwg.mxu0
    %v764 = vmul.f32 %v746, 0.17677669
    %v765 = vmul.f32 %v751, 0.17677669
    %v766 = vmul.f32 %v756, 0.17677669
    %v767 = vmul.f32 %v761, 0.17677669
    %v768 = vadd.f32 %v764, %v384
    %v769 = vadd.f32 %v765, %v385
    %v770 = vadd.f32 %v766, %v386
    %v771 = vadd.f32 %v767, %v387
    %v772 = vsel %vm84, %v768, -inf
    %773 = vmax.xlane.f32.xlu0 %v772
    %v774 = vpop.xlane.xlu0 %773
    %v775 = vsel %vm84, %v769, -inf
    %776 = vmax.xlane.f32.xlu0 %v775
    %v777 = vpop.xlane.xlu0 %776
    %v778 = vsel %vm84, %v770, -inf
    %779 = vmax.xlane.f32.xlu0 %v778
    %v780 = vpop.xlane.xlu0 %779
    %v781 = vsel %vm84, %v771, -inf
    %782 = vmax.xlane.f32.xlu0 %v781
    %v783 = vpop.xlane.xlu0 %782
    %v784 = vsub.f32 %v768, %v774
    %v785 = vsub.f32 %v769, %v777
    %v786 = vsub.f32 %v770, %v780
    %v787 = vsub.f32 %v771, %v783
    %v788 = vmul.f32 %v784, 1.442695
    %v789 = vpow.pop %v788
    %v790 = vmul.f32 %v785, 1.442695
    %v791 = vpow.pop %v790
    %v792 = vmul.f32 %v786, 1.442695
    %v793 = vpow.pop %v792
    %v794 = vmul.f32 %v787, 1.442695
    %v795 = vpow.pop %v794
    %v796 = vsel %vm84, %v789, 0.0
    %797 = vadd.xlane.f32.xlu0 %v796
    %v798 = vpop.xlane.xlu0 %797
    %v799 = vsel %vm84, %v791, 0.0
    %800 = vadd.xlane.f32.xlu0 %v799
    %v801 = vpop.xlane.xlu0 %800
    %v802 = vsel %vm84, %v793, 0.0
    %803 = vadd.xlane.f32.xlu0 %v802
    %v804 = vpop.xlane.xlu0 %803
    %v805 = vsel %vm84, %v795, 0.0
    %806 = vadd.xlane.f32.xlu0 %v805
    %v807 = vpop.xlane.xlu0 %806
    %v808 = vrcp.pop %v798
    %v809 = vrcp.pop %v801
    %v810 = vrcp.pop %v804
    %v811 = vrcp.pop %v807
    %v812 = vmul.f32 %v789, %v808
    %v813 = vmul.f32 %v791, %v809
    %v814 = vmul.f32 %v793, %v810
    %v815 = vmul.f32 %v795, %v811
    %820 = vrot.lane.b32.xlu0 %v358, 112
    %v821 = vpop.permute.xlu0 %820
    %822 = vrot.lane.b32.xlu0 %v363, 112
    %v823 = vpop.permute.xlu0 %822
    %824 = vrot.lane.b32.xlu0 %v368, 112
    %v825 = vpop.permute.xlu0 %824
    %826 = vrot.lane.b32.xlu0 %v373, 112
    %v827 = vpop.permute.xlu0 %826
    %v833 = vsel %vm84, %v812, 0
    %v836 = vsel %vm84, %v813, 0
    %v839 = vsel %vm84, %v814, 0
    %v842 = vsel %vm84, %v815, 0
    %844 = vmatprep.subr.mxu0 0.0
    %845 = vmatpush1.msra.mxu0 %v821
    %846 = vmatprep.subr.mxu0 0.0
    %847 = vmatpush1.msra.mxu0 %v823
    %848 = vmatprep.subr.mxu0 0.0
    %849 = vmatpush1.msra.mxu0 %v825
    %850 = vmatprep.subr.mxu0 0.0
    %851 = vmatpush1.msra.mxu0 %v827
    %852 = vmatprep.subr.mxu0 0.0
    %853 = vmatpush1.msra.mxu0 0.0
    %854 = vmatprep.subr.mxu0 0.0
    %855 = vmatpush1.msra.mxu0 0.0
    %856 = vmatprep.subr.mxu0 0.0
    %857 = vmatpush1.msra.mxu0 0.0
    %858 = vmatprep.subr.mxu0 0.0
    %859 = vmatpush1.msra.mxu0 0.0
    %860 = vmatprep.subr.mxu0 0.0
    %861 = vmatpush1.msra.mxu0 0.0
    %862 = vmatprep.subr.mxu0 0.0
    %863 = vmatpush1.msra.mxu0 0.0
    %864 = vmatprep.subr.mxu0 0.0
    %865 = vmatpush1.msra.mxu0 0.0
    %866 = vmatprep.subr.mxu0 0.0
    %867 = vmatpush1.msra.mxu0 0.0
    %868 = vmatprep.subr.mxu0 0.0
    %869 = vmatpush1.msra.mxu0 0.0
    %870 = vmatprep.subr.mxu0 0.0
    %871 = vmatpush1.msra.mxu0 0.0
    %872 = vmatprep.subr.mxu0 0.0
    %873 = vmatpush1.msra.mxu0 0.0
    %874 = vmatprep.subr.mxu0 0.0
    %875 = vmatpush1.msra.mxu0 0.0
    %876 = vmatprep.subr.mxu0 0.0
    %877 = vmatpush1.msra.mxu0 0.0
    %878 = vmatprep.subr.mxu0 0.0
    %879 = vmatpush1.msra.mxu0 0.0
    %880 = vmatprep.subr.mxu0 0.0
    %881 = vmatpush1.msra.mxu0 0.0
    %882 = vmatprep.subr.mxu0 0.0
    %883 = vmatpush1.msra.mxu0 0.0
    %884 = vmatprep.subr.mxu0 0.0
    %885 = vmatpush1.msra.mxu0 0.0
    %886 = vmatprep.subr.mxu0 0.0
    %887 = vmatpush1.msra.mxu0 0.0
    %888 = vmatprep.subr.mxu0 0.0
    %889 = vmatpush1.msra.mxu0 0.0
    %890 = vmatprep.subr.mxu0 0.0
    %891 = vmatpush1.msra.mxu0 0.0
    %892 = vmatprep.subr.mxu0 0.0
    %893 = vmatpush1.msra.mxu0 0.0
    %894 = vmatprep.subr.mxu0 0.0
    %895 = vmatpush1.msra.mxu0 0.0
    %896 = vmatprep.subr.mxu0 0.0
    %897 = vmatpush1.msra.mxu0 0.0
    %898 = vmatprep.subr.mxu0 0.0
    %899 = vmatpush1.msra.mxu0 0.0
    %900 = vmatprep.subr.mxu0 0.0
    %901 = vmatpush1.msra.mxu0 0.0
    %902 = vmatprep.subr.mxu0 0.0
    %903 = vmatpush1.msra.mxu0 0.0
    %904 = vmatprep.subr.mxu0 0.0
    %905 = vmatpush1.msra.mxu0 0.0
    %906 = vmatprep.subr.mxu0 0.0
    %907 = vmatpush1.msra.mxu0 0.0
    %908 = vmatprep.mubr.f32.mxu0 0.0
    %909 = vmatmul.mubr.f32.gmra.mrb[0].mxu0 %v833
    %v910 = vpop.f32.mrb[0].mxu0
    %v911 = vadd.f32 0.0, %v910
    %v912 = vpop.f32.mrb[0].mxu0
    %913 = vmatprep.mubr.f32.mxu0 0.0
    %914 = vmatmul.mubr.f32.gmra.mrb[0].mxu0 %v836
    %v915 = vpop.f32.mrb[0].mxu0
    %v916 = vadd.f32 0.0, %v915
    %v917 = vpop.f32.mrb[0].mxu0
    %918 = vmatprep.mubr.f32.mxu0 0.0
    %919 = vmatmul.mubr.f32.gmra.mrb[0].mxu0 %v839
    %v920 = vpop.f32.mrb[0].mxu0
    %v921 = vadd.f32 0.0, %v920
    %v922 = vpop.f32.mrb[0].mxu0
    %923 = vmatprep.mubr.f32.mxu0 0.0
    %924 = vmatmul.mubr.f32.gmra.mrb[0].mxu0 %v842
    %v925 = vpop.f32.mrb[0].mxu0
    %v926 = vadd.f32 0.0, %v925
    %v927 = vpop.f32.mrb[0].mxu0
    %928 = vdwg.mxu0
    %933 = vrot.lane.b32.xlu0 %v911, 16
    %v934 = vpop.permute.xlu0 %933
    %935 = vrot.lane.b32.xlu0 %v916, 16
    %v936 = vpop.permute.xlu0 %935
    %937 = vrot.lane.b32.xlu0 %v921, 16
    %v938 = vpop.permute.xlu0 %937
    %939 = vrot.lane.b32.xlu0 %v926, 16
    %v940 = vpop.permute.xlu0 %939
    %v945 = vsel %vm388, %v629, %v934
    %v946 = vsel %vm388, %v634, %v936
    %v947 = vsel %vm388, %v639, %v938
    %v948 = vsel %vm388, %v644, %v940
    %949 = vst.msk [vmem:[#allocation8] sm:$0xff] %vm84, %v945
    %950 = vst.msk [vmem:[#allocation8 + $0x8] sm:$0xff] %vm84, %v946
    %951 = vst.msk [vmem:[#allocation8 + $0x10] sm:$0xff] %vm84, %v947
    %952 = vst.msk [vmem:[#allocation8 + $0x18] sm:$0xff] %vm84, %v948
    // Predicated region
    $region26: #{tpu_custom_call.1} parent=1 // pred_check
      _
    $region27: #{tpu_custom_call.1} parent=1 // pred_check_branch
      %954 = sbr.rel (0) target = $region29
    $region28: #{tpu_custom_call.1} parent=1 // pred_region
      %s956 = ssub.s32 512, 512
      %957 = vsyncadd [#allocation4], %s956
      %s958 = sshll.u32 [#allocation8], 4
      %s959 = int_to_ptr.vmem [resolvable:$true] %s958
      %964 = dma.vmem_to_hbm [thread:$0]  %s959, 512, %s3, [#allocation4], 128, 128, 8
    $region29: #{tpu_custom_call.1} parent=1 // pred_fallthru
      _
    // Predicated region
    $region30: #{tpu_custom_call.1} parent=1 // pred_check
      _
    $region31: #{tpu_custom_call.1} parent=1 // pred_check_branch
      %966 = sbr.rel (0) target = $region33
    $region32: #{tpu_custom_call.1} parent=1 // pred_region
      %s968 = ssub.s32 512, 512
      %969 = vsyncadd [#allocation10], %s968
      %s970 = sshll.u32 [#allocation9], 4
      %s971 = int_to_ptr.vmem [resolvable:$true] %s970
      %976 = dma.vmem_to_hbm [thread:$0]  %s971, 512, %s4, [#allocation10], 128, 128, 8
    $region33: #{tpu_custom_call.1} parent=1 // pred_fallthru
      _
    // Predicated region
    $region34: #{tpu_custom_call.1} parent=1 // pred_check
      _
    $region35: #{tpu_custom_call.1} parent=1 // pred_check_branch
      %978 = sbr.rel (0) target = $region37
    $region36: #{tpu_custom_call.1} parent=1 // pred_region
      %s980 = ssub.s32 512, 512
      %981 = vsyncadd [#allocation10], %s980
      %s982 = sshll.u32 [#allocation11], 4
      %s983 = int_to_ptr.vmem [resolvable:$true] %s982
      %988 = dma.vmem_to_hbm [thread:$0]  %s983, 512, %s5, [#allocation10], 128, 128, 8
    $region37: #{tpu_custom_call.1} parent=1 // pred_fallthru
      _
    // Predicated region
    $region38: #{tpu_custom_call.1} parent=1 // pred_check
      _
    $region39: #{tpu_custom_call.1} parent=1 // pred_check_branch
      %990 = sbr.rel (0) target = $region41
    $region40: #{tpu_custom_call.1} parent=1 // pred_region
      %991 = dma.done [#allocation4], 512
    $region41: #{tpu_custom_call.1} parent=1 // pred_fallthru
      _
    // Predicated region
    $region42: #{tpu_custom_call.1} parent=1 // pred_check
      _
    $region43: #{tpu_custom_call.1} parent=1 // pred_check_branch
      %993 = sbr.rel (0) target = $region45
    $region44: #{tpu_custom_call.1} parent=1 // pred_region
      %994 = dma.done [#allocation10], 512
    $region45: #{tpu_custom_call.1} parent=1 // pred_fallthru
      _
    // Predicated region
    $region46: #{tpu_custom_call.1} parent=1 // pred_check
      _
    $region47: #{tpu_custom_call.1} parent=1 // pred_check_branch
      %996 = sbr.rel (0) target = $region49
    $region48: #{tpu_custom_call.1} parent=1 // pred_region
      %997 = dma.done [#allocation10], 512
    $region49: #{tpu_custom_call.1} parent=1 // pred_fallthru
      _
    %998 = vsyncpa [#allocation3], 1
    %999 = vsyncpa [#allocation6], 1
    %1000 = vsyncpa [#allocation4], 1
    %1001 = vsyncpa [#allocation10], 1

</llo_original>
